<compile_context>
chip_gen: v5e
topology: v5e:2x2
jax: 0.10.0
libtpu: 0.0.40
codegen_flags: <defaults>
</compile_context>

<pallas_src>
import jax
import jax.numpy as jnp
from jax.experimental import pallas as pl
from jax.experimental.pallas import tpu as pltpu

IN_F, HID, OUT_F = 2, 10, 1
TB = 4096   # batch rows per grid step (fixed for B >= TB)
SUB = 8     # sublane granularity for the batch dim


def _mlp_kernel(x_ref, w1_ref, b1_ref, w2t_ref, b2_ref, o_ref):
    # x_ref:   (tb, 2)   native-width input tile
    # w1_ref:  (2, 10)   fc1 weight (in, out)       - VMEM-resident
    # b1_ref:  (1, 10)   fc1 bias                   - VMEM-resident
    # w2t_ref: (1, 10)   fc2 weight as a row vector - VMEM-resident
    # b2_ref:  (1, 1)    fc2 bias                   - VMEM-resident
    # o_ref:   (tb, 1)   output tile
    x = x_ref[...]
    w1 = w1_ref[...]
    # fc1 as two lane-broadcast FMAs on the VPU (skip the MXU at K=2).
    h = x[:, 0:1] * w1[0:1, :] + x[:, 1:2] * w1[1:2, :] + b1_ref[...]
    h = jnp.maximum(h, 0.0)                                   # ReLU   (VPU)
    # fc2: VPU multiply + XLU lane-reduce -> (tb, 1).
    y = jnp.sum(h * w2t_ref[...], axis=-1, keepdims=True) + b2_ref[...]
    o_ref[...] = jax.nn.sigmoid(y)                            # sigmoid (EUP)


def _round_up(n: int, m: int) -> int:
    return ((n + m - 1) // m) * m


def net_forward(x, params):
    """Forward pass of Net. x: (B, 2) float32 -> (B, 1) float32."""
    w1, b1, w2t, b2 = params
    B = x.shape[0]

    # Fixed tile for large batches; small batches use one 8-row-aligned tile.
    tb = min(TB, _round_up(B, SUB))
    bp = _round_up(B, tb)
    # Batch-tail pad only (NO feature padding); a Python-level no-op when B
    # is already a multiple of the tile.
    xp = x if bp == B else jnp.pad(x, ((0, bp - B), (0, 0)))

    out = pl.pallas_call(
        _mlp_kernel,
        out_shape=jax.ShapeDtypeStruct((bp, OUT_F), jnp.float32),
        grid=(bp // tb,),
        in_specs=[
            pl.BlockSpec((tb, IN_F), lambda i: (i, 0)),   # x: tiled over batch
            pl.BlockSpec((IN_F, HID), lambda i: (0, 0)),  # w1: VMEM-resident
            pl.BlockSpec((1, HID), lambda i: (0, 0)),     # b1: VMEM-resident
            pl.BlockSpec((1, HID), lambda i: (0, 0)),     # w2^T: VMEM-resident
            pl.BlockSpec((1, 1), lambda i: (0, 0)),       # b2: VMEM-resident
        ],
        out_specs=pl.BlockSpec((tb, OUT_F), lambda i: (i, 0)),
        compiler_params=pltpu.CompilerParams(
            dimension_semantics=("parallel",),            # megacore on v7x
            vmem_limit_bytes=32 * 1024 * 1024,            # v7x-safe (64 MiB phys)
        ),
    )(xp, w1, b1, w2t, b2)

    return out if bp == B else out[:B]


def init_params(key):
    """Deterministic init mimicking nn.Linear's uniform(-1/sqrt(fan_in), ...)."""
    k1, k2, k3, k4 = jax.random.split(key, 4)
    bound1 = 1.0 / jnp.sqrt(jnp.float32(IN_F))
    bound2 = 1.0 / jnp.sqrt(jnp.float32(HID))
    # stored as (in, out): y = x @ W + b  (transpose of PyTorch's (out, in))
    w1 = jax.random.uniform(k1, (IN_F, HID), jnp.float32, -bound1, bound1)
    b1 = jax.random.uniform(k2, (HID,), jnp.float32, -bound1, bound1)
    w2 = jax.random.uniform(k3, (HID, OUT_F), jnp.float32, -bound2, bound2)
    b2 = jax.random.uniform(k4, (OUT_F,), jnp.float32, -bound2, bound2)
    return w1, b1, w2, b2


def prepare_params(w1, b1, w2, b2):
    """Reshape params ONCE into kernel-friendly 2-D forms (no padding at all)."""
    return (
        w1,                      # (2, 10)
        b1.reshape(1, HID),      # (1, 10)
        w2.reshape(1, HID),      # (10, 1) -> (1, 10) row vector (same order)
        b2.reshape(1, 1),        # (1, 1)
    )


def _reference(x, w1, b1, w2, b2):
    hi = jax.lax.Precision.HIGHEST
    h = jnp.maximum(jnp.dot(x, w1, precision=hi) + b1, 0.0)
    return jax.nn.sigmoid(jnp.dot(h, w2, precision=hi) + b2)


if __name__ == "__main__":
    key = jax.random.PRNGKey(0)
    k_params, k_x1, k_x2 = jax.random.split(key, 3)
    w1, b1, w2, b2 = init_params(k_params)
    params = prepare_params(w1, b1, w2, b2)

    # Small batch (single 8-row tile, grid=(1,)).
    B = 8
    x = jax.random.normal(k_x1, (B, IN_F), jnp.float32)
    out = jax.block_until_ready(net_forward(x, params))
    ref = _reference(x, w1, b1, w2, b2)
    assert out.shape == (B, OUT_F)
    assert jnp.allclose(out, ref, atol=1e-5), "mismatch vs reference (B=8)"

    # Larger ragged batch: tb=4096, bp=8192, grid=(2,) -> exercises the
    # multi-step pipelined grid, resident weights, and the tail-pad path.
    B2 = 4104
    x2 = jax.random.normal(k_x2, (B2, IN_F), jnp.float32)
    out2 = jax.block_until_ready(net_forward(x2, params))
    ref2 = _reference(x2, w1, b1, w2, b2)
    assert out2.shape == (B2, OUT_F)
    assert jnp.allclose(out2, ref2, atol=1e-5), "mismatch vs reference (B=4104)"

    print("KERNEL_OK")
</pallas_src>

<mosaic_0001>
module attributes {stable_mosaic.version = 11 : i64} {
  func.func @_mlp_kernel(%arg0: i32, %arg1: memref<8x2xf32, #tpu.memory_space<vmem>>, %arg2: memref<2x10xf32, #tpu.memory_space<vmem>>, %arg3: memref<1x10xf32, #tpu.memory_space<vmem>>, %arg4: memref<1x10xf32, #tpu.memory_space<vmem>>, %arg5: memref<1x1xf32, #tpu.memory_space<vmem>>, %arg6: memref<8x1xf32, #tpu.memory_space<vmem>>) attributes {dimension_semantics = [#tpu.dimension_semantics<parallel>], iteration_bounds = array<i64: 1>, scalar_prefetch = 0 : i64, scratch_operands = 0 : i64, tpu.core_type = #tpu.core_type<tc>, window_params = [{transform_indices = @transform_0, window_bounds = array<i64: 8, 2>}, {pipeline_mode = #tpu.pipeline_mode<synchronous>, transform_indices = @transform_1, window_bounds = array<i64: 2, 10>}, {pipeline_mode = #tpu.pipeline_mode<synchronous>, transform_indices = @transform_2, window_bounds = array<i64: 1, 10>}, {pipeline_mode = #tpu.pipeline_mode<synchronous>, transform_indices = @transform_3, window_bounds = array<i64: 1, 10>}, {pipeline_mode = #tpu.pipeline_mode<synchronous>, transform_indices = @transform_4, window_bounds = array<i64: 1, 1>}, {transform_indices = @transform_5, window_bounds = array<i64: 8, 1>}]} {
    %c0 = arith.constant 0 : index
    %c0_0 = arith.constant 0 : index
    %0 = vector.load %arg1[%c0, %c0_0] : memref<8x2xf32, #tpu.memory_space<vmem>>, vector<8x2xf32>
    %c0_1 = arith.constant 0 : index
    %c0_2 = arith.constant 0 : index
    %1 = vector.load %arg2[%c0_1, %c0_2] : memref<2x10xf32, #tpu.memory_space<vmem>>, vector<2x10xf32>
    %2 = vector.extract_strided_slice %0 {offsets = [0, 0], sizes = [8, 1], strides = [1, 1]} : vector<8x2xf32> to vector<8x1xf32>
    %3 = vector.extract_strided_slice %1 {offsets = [0, 0], sizes = [1, 10], strides = [1, 1]} : vector<2x10xf32> to vector<1x10xf32>
    %4 = vector.broadcast %2 : vector<8x1xf32> to vector<8x10xf32>
    %5 = vector.broadcast %3 : vector<1x10xf32> to vector<8x10xf32>
    %6 = arith.mulf %4, %5 : vector<8x10xf32>
    %7 = vector.extract_strided_slice %0 {offsets = [0, 1], sizes = [8, 1], strides = [1, 1]} : vector<8x2xf32> to vector<8x1xf32>
    %8 = vector.extract_strided_slice %1 {offsets = [1, 0], sizes = [1, 10], strides = [1, 1]} : vector<2x10xf32> to vector<1x10xf32>
    %9 = vector.broadcast %7 : vector<8x1xf32> to vector<8x10xf32>
    %10 = vector.broadcast %8 : vector<1x10xf32> to vector<8x10xf32>
    %11 = arith.mulf %9, %10 : vector<8x10xf32>
    %12 = arith.addf %6, %11 : vector<8x10xf32>
    %c0_3 = arith.constant 0 : index
    %c0_4 = arith.constant 0 : index
    %13 = vector.load %arg3[%c0_3, %c0_4] : memref<1x10xf32, #tpu.memory_space<vmem>>, vector<1x10xf32>
    %14 = vector.broadcast %13 : vector<1x10xf32> to vector<8x10xf32>
    %15 = arith.addf %12, %14 : vector<8x10xf32>
    %cst = arith.constant 0.000000e+00 : f32
    %16 = vector.broadcast %cst : f32 to vector<8x10xf32>
    %17 = arith.maximumf %15, %16 : vector<8x10xf32>
    %c0_5 = arith.constant 0 : index
    %c0_6 = arith.constant 0 : index
    %18 = vector.load %arg4[%c0_5, %c0_6] : memref<1x10xf32, #tpu.memory_space<vmem>>, vector<1x10xf32>
    %19 = vector.broadcast %18 : vector<1x10xf32> to vector<8x10xf32>
    %20 = arith.mulf %17, %19 : vector<8x10xf32>
    %cst_7 = arith.constant dense<0.000000e+00> : vector<8xf32>
    %21 = vector.multi_reduction <add>, %20, %cst_7 [1] : vector<8x10xf32> to vector<8xf32>
    %22 = vector.shape_cast %21 : vector<8xf32> to vector<8x1xf32>
    %c0_8 = arith.constant 0 : index
    %c0_9 = arith.constant 0 : index
    %23 = vector.load %arg5[%c0_8, %c0_9] : memref<1x1xf32, #tpu.memory_space<vmem>>, vector<1x1xf32>
    %24 = vector.broadcast %23 : vector<1x1xf32> to vector<8x1xf32>
    %25 = arith.addf %22, %24 : vector<8x1xf32>
    %26 = arith.negf %25 : vector<8x1xf32>
    %27 = math.exp %26 : vector<8x1xf32>
    %cst_10 = arith.constant 1.000000e+00 : f32
    %28 = vector.broadcast %cst_10 : f32 to vector<8x1xf32>
    %29 = arith.addf %28, %27 : vector<8x1xf32>
    %30 = arith.divf %28, %29 : vector<8x1xf32>
    %c0_11 = arith.constant 0 : index
    %c0_12 = arith.constant 0 : index
    %31 = vector.load %arg6[%c0_11, %c0_12] : memref<8x1xf32, #tpu.memory_space<vmem>>, vector<8x1xf32>
    tpu.vector_store %arg6[%c0_11, %c0_12], %30 {strides = array<i32>} : memref<8x1xf32, #tpu.memory_space<vmem>>, vector<8x1xf32>,
    return
  }
  func.func @transform_0(%arg0: i32) -> (i32, i32) {
    %c0_i32 = arith.constant 0 : i32
    %c0_i32_0 = arith.constant 0 : i32
    return %arg0, %c0_i32 : i32, i32
  }
  func.func @transform_1(%arg0: i32) -> (i32, i32) {
    %c0_i32 = arith.constant 0 : i32
    %c0_i32_0 = arith.constant 0 : i32
    %c0_i32_1 = arith.constant 0 : i32
    return %c0_i32, %c0_i32_0 : i32, i32
  }
  func.func @transform_2(%arg0: i32) -> (i32, i32) {
    %c0_i32 = arith.constant 0 : i32
    %c0_i32_0 = arith.constant 0 : i32
    %c0_i32_1 = arith.constant 0 : i32
    return %c0_i32, %c0_i32_0 : i32, i32
  }
  func.func @transform_3(%arg0: i32) -> (i32, i32) {
    %c0_i32 = arith.constant 0 : i32
    %c0_i32_0 = arith.constant 0 : i32
    %c0_i32_1 = arith.constant 0 : i32
    return %c0_i32, %c0_i32_0 : i32, i32
  }
  func.func @transform_4(%arg0: i32) -> (i32, i32) {
    %c0_i32 = arith.constant 0 : i32
    %c0_i32_0 = arith.constant 0 : i32
    %c0_i32_1 = arith.constant 0 : i32
    return %c0_i32, %c0_i32_0 : i32, i32
  }
  func.func @transform_5(%arg0: i32) -> (i32, i32) {
    %c0_i32 = arith.constant 0 : i32
    %c0_i32_0 = arith.constant 0 : i32
    return %arg0, %c0_i32 : i32, i32
  }
}

</mosaic_0001>

<llo_original>
// kernel: tpu_custom_call.1
$region0: #{tpu_custom_call.1}
  #allocation0 [shape = 'u32[]', space=smem, size = 0x4, offset = 0x4, fixed_abs, tag = 'smem constant byte address 0x4 - core index']
  #allocation1 [shape = 'u32[72,128]{1,0:T(1,128)}', space=vmem, size = 0x9000, scoped, tag = 'internal scratch']
  #allocation2 [shape = 'f32[1,1]{1,0:T(1,128)S(1)}', space=vmem, size = 0x200, scoped, tag = 'scoped memory for tpu_custom_call.1']
  %s0 = inlined_call_operand.vmem [shape: f32[8,2], index: 0, kind: input, shape index: {}]
  %s1 = inlined_call_operand.vmem [shape: f32[2,10], index: 1, kind: input, shape index: {}]
  %s2 = inlined_call_operand.vmem [shape: f32[1,10], index: 2, kind: input, shape index: {}]
  %s3 = inlined_call_operand.vmem [shape: f32[1,10], index: 3, kind: input, shape index: {}]
  %s4 = inlined_call_operand.<no memory space> [shape: f32[1,1], index: 4, kind: input, shape index: {}]
  %s5 = inlined_call_operand.vmem [shape: f32[8,1], index: 5, kind: output, shape index: {}]
  %s6 = sld [smem:[#allocation0]]
  $region30: #{tpu_custom_call.1} parent=0
    _
  %s8 = ssub.s32 1, %s6
  %s9 = scalar_select 0, %s8, %s6
  %v10 = vstv %s4
  %11 = vst [vmem:[#allocation2] sm:$0x1] %v10
  // Predicated region
  $region2: #{tpu_custom_call.1} parent=0 // pred_check
    _
  $region3: #{tpu_custom_call.1} parent=0 // pred_check_branch
    %13 = sbr.rel (0) target = $region5
  $region4: #{tpu_custom_call.1} parent=0 // pred_region
    _
  $region5: #{tpu_custom_call.1} parent=0 // pred_fallthru
    _
  // Predicated region
  $region6: #{tpu_custom_call.1} parent=0 // pred_check
    _
  $region7: #{tpu_custom_call.1} parent=0 // pred_check_branch
    %15 = sbr.rel (0) target = $region9
  $region8: #{tpu_custom_call.1} parent=0 // pred_region
    _
  $region9: #{tpu_custom_call.1} parent=0 // pred_fallthru
    _
  // Predicated region
  $region10: #{tpu_custom_call.1} parent=0 // pred_check
    _
  $region11: #{tpu_custom_call.1} parent=0 // pred_check_branch
    %17 = sbr.rel (0) target = $region13
  $region12: #{tpu_custom_call.1} parent=0 // pred_region
    _
  $region13: #{tpu_custom_call.1} parent=0 // pred_fallthru
    _
  // Predicated region
  $region14: #{tpu_custom_call.1} parent=0 // pred_check
    _
  $region15: #{tpu_custom_call.1} parent=0 // pred_check_branch
    %19 = sbr.rel (0) target = $region17
  $region16: #{tpu_custom_call.1} parent=0 // pred_region
    _
  $region17: #{tpu_custom_call.1} parent=0 // pred_fallthru
    _
  // Predicated region
  $region18: #{tpu_custom_call.1} parent=0 // pred_check
    _
  $region19: #{tpu_custom_call.1} parent=0 // pred_check_branch
    %21 = sbr.rel (0) target = $region21
  $region20: #{tpu_custom_call.1} parent=0 // pred_region
    _
  $region21: #{tpu_custom_call.1} parent=0 // pred_fallthru
    _
  %v22 = vld [vmem:[%s0] sm:$0xff]
  %v23 = vld [vmem:[%s1] sm:$0x3]
  %25 = vset.pattern.permute.xlu0 0
  %26 = vperm.xlu0 %25, %v22
  %v27 = vpop.permute.xlu0 %26
  %v29 = vperm.slane %v23, 0
  %v30 = vmul.f32 %v27, %v29
  %31 = vset.pattern.permute.xlu0 1
  %32 = vperm.xlu0 %31, %v22
  %v33 = vpop.permute.xlu0 %32
  %v35 = vperm.slane %v23, 1
  %v36 = vmul.f32 %v33, %v35
  %v37 = vadd.f32 %v30, %v36
  %v38 = vld [vmem:[%s2] sm:$0x1]
  %v40 = vperm.slane %v38, 0
  %v42 = vadd.f32 %v37, %v40
  %v43 = vmax.f32 %v42, 0.0
  %v44 = vld [vmem:[%s3] sm:$0x1]
  %v46 = vperm.slane %v44, 0
  %v48 = vmul.f32 %v43, %v46
  %vm49 = vcmask 80896
  %v50 = vsel %vm49, %v48, 0.0
  %51 = vadd.xlane.f32.xlu0 %v50
  %v52 = vpop.xlane.xlu0 %51
  %v53 = vld [vmem:[#allocation2] sm:$0x1]
  %v55 = vperm.slane %v53, 0
  %v57 = vadd.f32 %v52, %v55
  %v58 = vxor.u32 %v57, 2147483648
  %v59 = vmul.f32 %v58, 1.442695
  %v60 = vpow.pop %v59
  %v61 = vadd.f32 %v60, 1.0
  %v62 = vrcp.pop %v61
  %v63 = vmul.f32 %v61, %v62
  %v64 = vsub.f32 1.0, %v63
  %v65 = vmul.f32 %v62, %v64
  %v66 = vadd.f32 %v62, %v65
  %vm67 = vweird.f32 %v61
  %vm68 = vweird.f32 %v62
  %vm69 = vmor %vm67, %vm68
  %v70 = vsel %vm69, %v62, %v66
  %v71 = vand.u32 2147483647, %v61
  %vm72 = vcmp.eq.f32.partialorder %v71, 8.507059e+37
  %v73 = vand.u32 %v61, 2147483648
  %v74 = vor.u32 1.1754944e-38, %v73
  %v75 = vsel %vm72, %v74, %v70
  %v76 = vmul.f32 1.0, %v75
  %vm77 = vcmask 7168
  %78 = vst.msk [vmem:[%s5] sm:$0xff] %vm77, %v76
  // Predicated region
  $region22: #{tpu_custom_call.1} parent=0 // pred_check
    _
  $region23: #{tpu_custom_call.1} parent=0 // pred_check_branch
    %80 = sbr.rel (0) target = $region25
  $region24: #{tpu_custom_call.1} parent=0 // pred_region
    _
  $region25: #{tpu_custom_call.1} parent=0 // pred_fallthru
    _
  // Predicated region
  $region26: #{tpu_custom_call.1} parent=0 // pred_check
    _
  $region27: #{tpu_custom_call.1} parent=0 // pred_check_branch
    %82 = sbr.rel (0) target = $region29
  $region28: #{tpu_custom_call.1} parent=0 // pred_region
    _
  $region29: #{tpu_custom_call.1} parent=0 // pred_fallthru
    _

</llo_original>
